<compile_context>
chip_gen: v7x
topology: tpu7x:2x2x1
jax: 0.10.0
libtpu: 0.0.40
codegen_flags: <defaults>
</compile_context>

<pallas_src>
import functools
import math

import jax
import jax.numpy as jnp
from jax.experimental import pallas as pl
from jax.experimental.pallas import tpu as pltpu


# ---------------------------------------------------------------------------
# Scaled dot-product attention — Pallas TPU kernel
# ---------------------------------------------------------------------------

def _attention_block(q, k, v, mask, scale):
    """All-heads attention tile.

    q:(H,TQ,Dk) k:(H,Sk,Dk) v:(H,Sk,Dv) mask:(TQ,Sk) int8 or None."""
    # scores = q @ k^T, batched over heads, contracting the last axes (no k transpose).
    s = jax.lax.dot_general(
        q, k, dimension_numbers=(((2,), (2,)), ((0,), (0,))),
        preferred_element_type=jnp.float32)
    s = s * jnp.float32(scale)
    if mask is not None:
        # torch semantics: attn.masked_fill(mask, 0) happens *before* exp.
        cond = jnp.broadcast_to((mask != 0)[None, :, :], s.shape)
        s = jnp.where(cond, jnp.float32(0.0), s)
    # Row-max subtraction: identical to the module's exp/sum, numerically safe.
    m = jnp.max(s, axis=-1, keepdims=True)
    e = jnp.exp(s - m)
    denom = jnp.sum(e, axis=-1, keepdims=True)
    attn = e * pl.reciprocal(denom, approx=True)        # EUP vrcp — ~free slot
    # TODO(synk): training-mode dropout(p=0.1) on `attn` would need pltpu.prng_*;
    # at inference dropout is the identity, so it is omitted.
    return jax.lax.dot_general(
        attn.astype(v.dtype), v,
        dimension_numbers=(((2,), (1,)), ((0,), (0,))),
        preferred_element_type=jnp.float32)


def _sdpa_kernel(q_ref, k_ref, v_ref, o_ref, *, scale):
    out = _attention_block(q_ref[0], k_ref[0], v_ref[0], None, scale)
    o_ref[0] = out.astype(o_ref.dtype)


def _sdpa_kernel_masked(q_ref, k_ref, v_ref, m_ref, o_ref, *, scale):
    out = _attention_block(q_ref[0], k_ref[0], v_ref[0], m_ref[0], scale)
    o_ref[0] = out.astype(o_ref.dtype)


def _round_up(x, m):
    return ((x + m - 1) // m) * m


def _pad_axis(x, axis, target):
    amount = target - x.shape[axis]
    if amount == 0:
        return x
    pads = [(0, 0)] * x.ndim
    pads[axis] = (0, amount)
    return jnp.pad(x, pads)


def _sublane_multiple(dtype):
    # Packed sublane count: 8 for 32-bit, 16 for bf16, 32 for int8/fp8.
    return max(8, 32 // jnp.dtype(dtype).itemsize)


def _default_block_q():
    try:
        kind = jax.devices()[0].device_kind.lower()
    except Exception:
        return 256
    if "v6" in kind:
        return 512          # 128 MiB VMEM: bigger tiles amortize per-step overhead
    return 256              # v2-v5 (128-wide MXU) and v7x (64 MiB VMEM)


def _vmem_cap_bytes():
    try:
        return int(pltpu.get_tpu_info().vmem_capacity_bytes)
    except Exception:
        return 64 << 20     # conservative (v7x-sized) fallback


@functools.partial(jax.jit, static_argnames=("block_q", "compute_dtype"))
def scaled_dot_product_attention(q, k, v, mask=None, *, block_q=None,
                                 compute_dtype=None):
    """q:(B,H,Sq,Dk) k:(B,H,Sk,Dk) v:(B,H,Sk,Dv) mask:(B,Sq,Sk) (nonzero == masked)."""
    B, H, Sq, Dk = q.shape
    Bk, Hk, Sk, Dk2 = k.shape
    Bv, Hv, Sk2, Dv = v.shape
    assert (Bk, Hk, Dk2) == (B, H, Dk) and (Bv, Hv, Sk2) == (B, H, Sk)
    scale = 1.0 / math.sqrt(Dk)          # true d_k
    out_dtype = q.dtype

    if compute_dtype is not None:        # optional bf16 MXU path (v6e/v7x)
        q = q.astype(compute_dtype)
        k = k.astype(compute_dtype)
        v = v.astype(compute_dtype)
    cdtype = q.dtype
    itemsize = jnp.dtype(cdtype).itemsize
    sub = _sublane_multiple(cdtype)

    if block_q is None:
        block_q = _default_block_q()
    if Sq <= block_q:
        # Full-extent q block: legal regardless of (sublane,128), no padding at all.
        block_q = Sq
        sq_p = Sq
    else:
        block_q = max(sub, (block_q // sub) * sub)   # dtype-aligned sublane tile
        sq_p = _round_up(Sq, block_q)
        q = _pad_axis(q, 2, sq_p)

    grid = (B, sq_p // block_q)

    # Feature dims are NOT padded: last block dim == full array dim is legal and
    # avoids the 16x HBM/VMEM inflation of padding Dk/Dv=8 up to 128.
    in_specs = [
        pl.BlockSpec((1, H, block_q, Dk), lambda b, qi: (b, 0, qi, 0)),
        # K/V blocks indexed by batch only -> resident across q tiles.
        # TODO(synk): pipeline_mode=pl.Buffered(1) would halve their VMEM footprint
        # (their block index never changes along the q axis).
        pl.BlockSpec((1, H, Sk, Dk), lambda b, qi: (b, 0, 0, 0)),
        pl.BlockSpec((1, H, Sk, Dv), lambda b, qi: (b, 0, 0, 0)),
    ]
    args = [q, k, v]
    kernel = functools.partial(_sdpa_kernel, scale=scale)
    mask_block_bytes = 0
    if mask is not None:
        # Mask stays (B, Sq, Sk): no H-fold broadcast materialized in HBM.
        mask_i8 = mask.astype(jnp.int8)
        if sq_p != Sq:
            mask_i8 = _pad_axis(mask_i8, 1, sq_p)
        in_specs.append(pl.BlockSpec((1, block_q, Sk), lambda b, qi: (b, qi, 0)))
        args.append(mask_i8)
        kernel = functools.partial(_sdpa_kernel_masked, scale=scale)
        mask_block_bytes = block_q * Sk

    out_specs = pl.BlockSpec((1, H, block_q, Dv), lambda b, qi: (b, 0, qi, 0))

    # Scoped-VMEM budget from the (double-buffered) block sizes + f32 live values,
    # capped at 80% of per-core VMEM (leaves headroom on v7x's 64 MiB).
    in_block_bytes = H * (block_q * Dk + Sk * Dk + Sk * Dv) * itemsize + mask_block_bytes
    out_block_bytes = H * block_q * Dv * itemsize
    live_f32 = 3 * H * block_q * Sk * 4
    needed = 2 * (in_block_bytes + out_block_bytes) + live_f32 + (4 << 20)
    vmem_limit = int(min(max(needed, 32 << 20), int(0.8 * _vmem_cap_bytes())))

    cost = pl.CostEstimate(
        flops=2 * B * H * sq_p * Sk * (Dk + Dv),
        transcendentals=B * H * sq_p * Sk,
        bytes_accessed=int(sum(a.size * a.dtype.itemsize for a in args)
                           + B * H * sq_p * Dv * jnp.dtype(out_dtype).itemsize),
    )

    out = pl.pallas_call(
        kernel,
        out_shape=jax.ShapeDtypeStruct((B, H, sq_p, Dv), out_dtype),
        grid_spec=pltpu.PrefetchScalarGridSpec(
            num_scalar_prefetch=0,
            grid=grid,
            in_specs=in_specs,
            out_specs=out_specs,
        ),
        compiler_params=pltpu.CompilerParams(
            # batch axis "parallel" (disjoint K/V per core), q-tile axis "arbitrary"
            # so megacore sharding does not duplicate K/V DMA for one batch element.
            dimension_semantics=("parallel", "arbitrary"),
            vmem_limit_bytes=vmem_limit,
        ),
        cost_estimate=cost,
    )(*args)
    # TODO(synk): for Sk large enough that H*Sk*(Dk+Dv) K/V blocks + f32 scores no
    # longer fit v7x's 64 MiB VMEM, add a third "arbitrary" grid axis over Sk with
    # flash-style online-softmax m/l/acc accumulators in VMEM scratch.
    if sq_p != Sq:
        out = out[:, :, :Sq, :]
    return out


# ---------------------------------------------------------------------------
# Pure-jnp reference attention (same module semantics)
# ---------------------------------------------------------------------------

def _sdpa_reference(q, k, v, mask=None):
    d_k = q.shape[-1]
    s = jnp.einsum("bhqd,bhkd->bhqk", q, k,
                   precision=jax.lax.Precision.HIGHEST) / math.sqrt(d_k)
    if mask is not None:
        s = jnp.where(mask[:, None] != 0, 0.0, s)
    s = s - jnp.max(s, axis=-1, keepdims=True)
    e = jnp.exp(s)
    attn = e / jnp.sum(e, axis=-1, keepdims=True)
    return jnp.einsum("bhqk,bhkd->bhqd", attn, v, precision=jax.lax.Precision.HIGHEST)


# ---------------------------------------------------------------------------
# TransformerDecoder forward (jnp plumbing around the Pallas attention kernel)
# ---------------------------------------------------------------------------

def _linear(x, wb):
    w, b = wb
    return x @ w + b


def _layer_norm(x, p, eps=1e-8):
    # Matches the module's LayerNorm: torch's .std() is the *unbiased* (N-1) std.
    mean = jnp.mean(x, axis=-1, keepdims=True)
    n = x.shape[-1]
    var = jnp.sum((x - mean) ** 2, axis=-1, keepdims=True) / (n - 1)
    return p["gamma"] * (x - mean) / (jnp.sqrt(var) + eps) + p["beta"]


def _multi_head_attention(p, queries, keys, values, mask, attn_fn):
    B, Sq, d_model = queries.shape
    H, _, Df = p["wq"].shape

    def proj(x, w, b):
        # Fused per-head Linear: one (d_model, H*Df) matmul instead of H tiny ones.
        wf = w.transpose(1, 0, 2).reshape(d_model, H * Df)
        bf = b.reshape(H * Df)
        y = x @ wf + bf                                         # (B, S, H*Df)
        return y.reshape(x.shape[0], x.shape[1], H, Df).transpose(0, 2, 1, 3)

    Q = proj(queries, p["wq"], p["bq"])                         # (B, H, Sq, Df)
    K = proj(keys, p["wk"], p["bk"])                            # (B, H, Sk, Df)
    V = proj(values, p["wv"], p["bv"])                          # (B, H, Sk, Df)
    ctx = attn_fn(Q, K, V, mask)                                # (B, H, Sq, Df)
    ctx = ctx.transpose(0, 2, 1, 3).reshape(B, Sq, H * Df)      # head-concat order
    return _linear(ctx, p["proj"])


def _decoder_block(p, x, enc_out, src_mask, tgt_mask, attn_fn):
    att = _multi_head_attention(p["mha1"], x, x, x, src_mask, attn_fn)
    x = x + _layer_norm(att, p["ln1"])          # dropout is identity at inference
    att = _multi_head_attention(p["mha2"], x, enc_out, enc_out, tgt_mask, attn_fn)
    x = x + _layer_norm(att, p["ln2"])
    pos = _linear(jax.nn.relu(_linear(x, p["ff1"])), p["ff2"])
    x = x + _layer_norm(pos, p["ln2"])          # NOTE: the module reuses layer_norm2 here
    return x


@functools.partial(jax.jit, static_argnames=("use_pallas",))
def transformer_decoder_forward(params, x, enc_out, src_mask=None, tgt_mask=None,
                                *, use_pallas=True):
    # NOTE: TransformerDecoder.forward never applies position_embedding, so neither do we.
    attn_fn = scaled_dot_product_attention if use_pallas else _sdpa_reference
    for blk in params["blocks"]:
        x = _decoder_block(blk, x, enc_out, src_mask, tgt_mask, attn_fn)
    flat = x.reshape(x.shape[0], -1)
    high = _linear(_linear(flat, params["high1"]), params["high2"])   # dropout = identity
    low = _linear(_linear(flat, params["low1"]), params["low2"])
    return high, low


# ---------------------------------------------------------------------------
# Parameter construction (mirrors the torch module's structure)
# ---------------------------------------------------------------------------

def _init_linear(key, fan_in, fan_out):
    kw, kb = jax.random.split(key)
    bound = 1.0 / math.sqrt(fan_in)
    w = jax.random.uniform(kw, (fan_in, fan_out), jnp.float32, -bound, bound)
    b = jax.random.uniform(kb, (fan_out,), jnp.float32, -bound, bound)
    return (w, b)


def _init_mha(key, d_model, d_feature, n_heads):
    kq, kk, kv, kp = jax.random.split(key, 4)

    def heads(k):
        ws, bs = zip(*(_init_linear(hk, d_model, d_feature)
                       for hk in jax.random.split(k, n_heads)))
        return jnp.stack(ws), jnp.stack(bs)

    wq, bq = heads(kq)
    wk, bk = heads(kk)
    wv, bv = heads(kv)
    return dict(wq=wq, bq=bq, wk=wk, bk=bk, wv=wv, bv=bv,
                proj=_init_linear(kp, d_feature * n_heads, d_model))


def _init_block(key, d_model, d_ff, n_heads):
    k = jax.random.split(key, 4)
    d_feature = d_model // n_heads
    ln = lambda: dict(gamma=jnp.ones((d_model,), jnp.float32),
                      beta=jnp.zeros((d_model,), jnp.float32))
    return dict(
        mha1=_init_mha(k[0], d_model, d_feature, n_heads),
        mha2=_init_mha(k[1], d_model, d_feature, n_heads),
        ff1=_init_linear(k[2], d_model, d_ff),
        ff2=_init_linear(k[3], d_ff, d_model),
        ln1=ln(), ln2=ln(),   # layer_norm3 exists in the module but is never used in forward
    )


def init_transformer_decoder(key, n_blocks, d_model, n_heads, d_ff, flat_dim):
    keys = jax.random.split(key, n_blocks + 4)
    return dict(
        blocks=[_init_block(keys[i], d_model, d_ff, n_heads) for i in range(n_blocks)],
        high1=_init_linear(keys[n_blocks + 0], flat_dim, 256),
        high2=_init_linear(keys[n_blocks + 1], 256, 1),
        low1=_init_linear(keys[n_blocks + 2], flat_dim, 256),
        low2=_init_linear(keys[n_blocks + 3], 256, 1),
    )


# ---------------------------------------------------------------------------
# Self-test
# ---------------------------------------------------------------------------

if __name__ == "__main__":
    # Shapes implied by the module: high/low heads take flatten(x) with 92*16
    # features, so seq_len=92 and d_model=16; everything else kept small.
    B, S_DEC, S_ENC = 2, 92, 64
    D_MODEL, N_HEADS, D_FF, N_BLOCKS = 16, 2, 32, 2
    D_FEAT = D_MODEL // N_HEADS

    root = jax.random.PRNGKey(0)
    k_par, k_x, k_enc, k_mask, k_q, k_k, k_v, k_m = jax.random.split(root, 8)

    params = init_transformer_decoder(k_par, N_BLOCKS, D_MODEL, N_HEADS, D_FF,
                                      S_DEC * D_MODEL)
    x = jax.random.normal(k_x, (B, S_DEC, D_MODEL), jnp.float32)
    enc_out = jax.random.normal(k_enc, (B, S_ENC, D_MODEL), jnp.float32)
    src_mask = jax.random.bernoulli(k_mask, 0.15, (B, S_DEC, S_DEC))

    # --- 1) isolated attention kernel vs. jnp reference (unmasked + masked) ---
    q = jax.random.normal(k_q, (B, N_HEADS, S_DEC, D_FEAT), jnp.float32)
    k = jax.random.normal(k_k, (B, N_HEADS, S_ENC, D_FEAT), jnp.float32)
    v = jax.random.normal(k_v, (B, N_HEADS, S_ENC, D_FEAT), jnp.float32)
    m = jax.random.bernoulli(k_m, 0.2, (B, S_DEC, S_ENC))

    out = jax.block_until_ready(scaled_dot_product_attention(q, k, v))
    ref = _sdpa_reference(q, k, v)
    assert out.shape == ref.shape
    assert jnp.allclose(out, ref, atol=2e-2, rtol=2e-2), "attention (no mask) mismatch"

    out_m = jax.block_until_ready(scaled_dot_product_attention(q, k, v, m))
    ref_m = _sdpa_reference(q, k, v, m)
    assert jnp.allclose(out_m, ref_m, atol=2e-2, rtol=2e-2), "attention (masked) mismatch"

    # --- 2) full TransformerDecoder forward: Pallas attention vs. jnp reference ---
    high, low = transformer_decoder_forward(params, x, enc_out, src_mask=src_mask,
                                            use_pallas=True)
    high = jax.block_until_ready(high)
    low = jax.block_until_ready(low)
    high_ref, low_ref = transformer_decoder_forward(params, x, enc_out,
                                                    src_mask=src_mask, use_pallas=False)
    assert high.shape == (B, 1) and low.shape == (B, 1)
    assert jnp.allclose(high, high_ref, atol=5e-2, rtol=5e-2), "decoder 'high' mismatch"
    assert jnp.allclose(low, low_ref, atol=5e-2, rtol=5e-2), "decoder 'low' mismatch"

    print("KERNEL_OK")
</pallas_src>

<mosaic_0001>
module attributes {stable_mosaic.version = 11 : i64} {
  func.func @_sdpa_kernel(%arg0: i32, %arg1: i32, %arg2: memref<1x2x92x8xf32, #tpu.memory_space<vmem>>, %arg3: memref<1x2x64x8xf32, #tpu.memory_space<vmem>>, %arg4: memref<1x2x64x8xf32, #tpu.memory_space<vmem>>, %arg5: memref<1x2x92x8xf32, #tpu.memory_space<vmem>>) attributes {dimension_semantics = [#tpu.dimension_semantics<parallel>, #tpu.dimension_semantics<arbitrary>], iteration_bounds = array<i64: 2, 1>, scalar_prefetch = 0 : i64, scratch_operands = 0 : i64, tpu.core_type = #tpu.core_type<tc>, window_params = [{transform_indices = @transform_0, window_bounds = array<i64: 1, 2, 92, 8>}, {transform_indices = @transform_1, window_bounds = array<i64: 1, 2, 64, 8>}, {transform_indices = @transform_2, window_bounds = array<i64: 1, 2, 64, 8>}, {transform_indices = @transform_3, window_bounds = array<i64: 1, 2, 92, 8>}]} {
    %c0 = arith.constant 0 : index
    %c0_0 = arith.constant 0 : index
    %c0_1 = arith.constant 0 : index
    %c0_2 = arith.constant 0 : index
    %0 = vector.load %arg2[%c0, %c0_0, %c0_1, %c0_2] : memref<1x2x92x8xf32, #tpu.memory_space<vmem>>, vector<1x2x92x8xf32>
    %1 = vector.shape_cast %0 : vector<1x2x92x8xf32> to vector<2x92x8xf32>
    %c0_3 = arith.constant 0 : index
    %c0_4 = arith.constant 0 : index
    %c0_5 = arith.constant 0 : index
    %c0_6 = arith.constant 0 : index
    %2 = vector.load %arg3[%c0_3, %c0_4, %c0_5, %c0_6] : memref<1x2x64x8xf32, #tpu.memory_space<vmem>>, vector<1x2x64x8xf32>
    %3 = vector.shape_cast %2 : vector<1x2x64x8xf32> to vector<2x64x8xf32>
    %c0_7 = arith.constant 0 : index
    %c0_8 = arith.constant 0 : index
    %c0_9 = arith.constant 0 : index
    %c0_10 = arith.constant 0 : index
    %4 = vector.load %arg4[%c0_7, %c0_8, %c0_9, %c0_10] : memref<1x2x64x8xf32, #tpu.memory_space<vmem>>, vector<1x2x64x8xf32>
    %5 = vector.shape_cast %4 : vector<1x2x64x8xf32> to vector<2x64x8xf32>
    %cst = arith.constant dense<0.000000e+00> : vector<2x92x64xf32>
    %6 = tpu.matmul %1, %3, %cst {dimension_numbers = #tpu.dot_dimension_numbers<[2], [2], [1], [1], [0, 0, 0, 1, 1, 1], [0], [0]>} : vector<2x92x8xf32>, vector<2x64x8xf32>, vector<2x92x64xf32> -> vector<2x92x64xf32>
    %cst_11 = arith.constant 0.353553385 : f32
    %7 = vector.broadcast %cst_11 : f32 to vector<2x92x64xf32>
    %8 = arith.mulf %6, %7 : vector<2x92x64xf32>
    %cst_12 = arith.constant dense<0xFF800000> : vector<2x92xf32>
    %9 = vector.multi_reduction <maximumf>, %8, %cst_12 [2] : vector<2x92x64xf32> to vector<2x92xf32>
    %10 = vector.shape_cast %9 : vector<2x92xf32> to vector<2x92x1xf32>
    %11 = vector.broadcast %10 : vector<2x92x1xf32> to vector<2x92x64xf32>
    %12 = arith.subf %8, %11 : vector<2x92x64xf32>
    %13 = math.exp %12 : vector<2x92x64xf32>
    %cst_13 = arith.constant dense<0.000000e+00> : vector<2x92xf32>
    %14 = vector.multi_reduction <add>, %13, %cst_13 [2] : vector<2x92x64xf32> to vector<2x92xf32>
    %15 = vector.shape_cast %14 : vector<2x92xf32> to vector<2x92x1xf32>
    %16 = tpu.reciprocal %15 {approx = true} : vector<2x92x1xf32> -> vector<2x92x1xf32>
    %17 = vector.broadcast %16 : vector<2x92x1xf32> to vector<2x92x64xf32>
    %18 = arith.mulf %13, %17 : vector<2x92x64xf32>
    %cst_14 = arith.constant dense<0.000000e+00> : vector<2x92x8xf32>
    %19 = tpu.matmul %18, %5, %cst_14 {dimension_numbers = #tpu.dot_dimension_numbers<[2], [1], [1], [2], [0, 0, 0, 1, 1, 2], [0], [0]>} : vector<2x92x64xf32>, vector<2x64x8xf32>, vector<2x92x8xf32> -> vector<2x92x8xf32>
    %c0_15 = arith.constant 0 : index
    %c0_16 = arith.constant 0 : index
    %c0_17 = arith.constant 0 : index
    %c0_18 = arith.constant 0 : index
    %20 = vector.load %arg5[%c0_15, %c0_16, %c0_17, %c0_18] : memref<1x2x92x8xf32, #tpu.memory_space<vmem>>, vector<1x2x92x8xf32>
    %21 = vector.shape_cast %20 : vector<1x2x92x8xf32> to vector<2x92x8xf32>
    %22 = vector.shape_cast %19 : vector<2x92x8xf32> to vector<1x2x92x8xf32>
    tpu.vector_store %arg5[%c0_15, %c0_16, %c0_17, %c0_18], %22 {strides = array<i32>} : memref<1x2x92x8xf32, #tpu.memory_space<vmem>>, vector<1x2x92x8xf32>,
    return
  }
  func.func @transform_0(%arg0: i32, %arg1: i32) -> (i32, i32, i32, i32) {
    %c0_i32 = arith.constant 0 : i32
    %c0_i32_0 = arith.constant 0 : i32
    %c0_i32_1 = arith.constant 0 : i32
    return %arg0, %c0_i32, %arg1, %c0_i32_0 : i32, i32, i32, i32
  }
  func.func @transform_1(%arg0: i32, %arg1: i32) -> (i32, i32, i32, i32) {
    %c0_i32 = arith.constant 0 : i32
    %c0_i32_0 = arith.constant 0 : i32
    %c0_i32_1 = arith.constant 0 : i32
    %c0_i32_2 = arith.constant 0 : i32
    return %arg0, %c0_i32, %c0_i32_0, %c0_i32_1 : i32, i32, i32, i32
  }
  func.func @transform_2(%arg0: i32, %arg1: i32) -> (i32, i32, i32, i32) {
    %c0_i32 = arith.constant 0 : i32
    %c0_i32_0 = arith.constant 0 : i32
    %c0_i32_1 = arith.constant 0 : i32
    %c0_i32_2 = arith.constant 0 : i32
    return %arg0, %c0_i32, %c0_i32_0, %c0_i32_1 : i32, i32, i32, i32
  }
  func.func @transform_3(%arg0: i32, %arg1: i32) -> (i32, i32, i32, i32) {
    %c0_i32 = arith.constant 0 : i32
    %c0_i32_0 = arith.constant 0 : i32
    %c0_i32_1 = arith.constant 0 : i32
    return %arg0, %c0_i32, %arg1, %c0_i32_0 : i32, i32, i32, i32
  }
}

</mosaic_0001>

<llo_original>
// kernel: scaled_dot_product_attention.1
$region0: #{scaled_dot_product_attention.1}
  #allocation0 [shape = 'u32[]', space=smem, size = 0x4, offset = 0x4, fixed_abs, tag = 'smem constant byte address 0x4 - core index']
  #allocation1 [shape = 'u32[144,128]{1,0:T(1,128)}', space=vmem, size = 0x12000, scoped, tag = 'internal scratch']
  %s0 = inlined_call_operand.vmem [shape: f32[2,2,92,8], index: 0, kind: input, shape index: {}]
  %s1 = inlined_call_operand.vmem [shape: f32[2,2,64,8], index: 1, kind: input, shape index: {}]
  %s2 = inlined_call_operand.vmem [shape: f32[2,2,64,8], index: 2, kind: input, shape index: {}]
  %s3 = inlined_call_operand.vmem [shape: f32[2,2,92,8], index: 3, kind: output, shape index: {}]
  %s4 = sld [smem:[#allocation0]]
  $region45: #{scaled_dot_product_attention.1} parent=0
    _
  %s6 = ssub.s32 1, %s4
  %s7 = scalar_select 0, %s6, %s4
  loop: start=0, step=1, limit=4
  $region2: #{scaled_dot_product_attention.1} parent=0 // loop_pre_header
    _
  $region3: #{scaled_dot_product_attention.1} parent=0 // loop_header
    %s9 = sphi 0, %s13
    %p10 = scmp.ge.s32.totalorder %s9, 4
    %s16 = sphi 0, %s28
    %s17 = sphi 0, %s24
    %s18 = sphi 0, %s16
    %s19 = sphi 0, %s17
    %s20 = sphi 0, %s18
    %s21 = sphi 0, %s19
    %s33 = sphi 0, %s35
    %s36 = sphi 0, %s33
    %s37 = sphi 0, %s36
    %s53 = sphi 0, %s37
    %s59 = sphi 0, %s61
    %s62 = sphi 0, %s59
    %s63 = sphi 0, %s62
    %s79 = sphi 0, %s63
    %s85 = sphi 0, %s87
    %s88 = sphi 0, %s85
    %s89 = sphi 0, %s88
    %s105 = sphi 0, %s89
    %s113 = sphi 0, %s115
    %s116 = sphi 0, %s113
    %s117 = sphi 0, %s116
    %s133 = sphi 0, %s117
  $region4: #{scaled_dot_product_attention.1} parent=0 // loop_header_branch
    %12 = sbr.rel (%p10) target = $region8
  $region5: #{scaled_dot_product_attention.1} parent=0 // loop_body
    %s14 = ssub.s32 %s9, 1
    %s15 = ssub.s32 %s9, 2
    %s22 = sadd.s32 1, %s17
    %p23 = scmp.ge.s32.totalorder %s22, 1
    %s24 = scalar_select %p23, 0, %s22
    %s25 = sadd.s32 1, %s16
    %s26 = scalar_select %p23, %s25, %s16
    %p27 = scmp.ge.s32.totalorder %s26, 2
    %s28 = scalar_select %p27, 0, %s26
    %s29 = ssub.s32 %s16, %s28
    %s30 = ssub.s32 %s17, %s24
    %s31 = sor.u32 %s29, %s30
    %p32 = scmp.eq.s32.totalorder %s31, 0
    %s34 = sadd.s32 %s33, 1
    %s35 = scalar_select %p32, %s33, %s34
    %p38 = pneg %p32
    %p39 = scmp.eq.s32.totalorder %s9, 1
    %p40 = por %p38, %p39
    %p41 = scmp.ne.s32.totalorder %s33, %s36
    %p42 = scmp.eq.s32.totalorder %s9, 0
    %p43 = por %p41, %p42
    %p44 = scmp.ne.s32.totalorder %s33, %s36
    %p45 = scmp.eq.s32.totalorder %s14, 1
    %p46 = por %p44, %p45
    %p47 = scmp.ne.s32.totalorder %s36, %s37
    %p48 = scmp.eq.s32.totalorder %s14, 0
    %p49 = por %p47, %p48
    %p50 = scmp.ne.s32.totalorder %s36, %s37
    %p51 = scmp.eq.s32.totalorder %s15, 1
    %p52 = por %p50, %p51
    %p54 = scmp.ne.s32.totalorder %s37, %s53
    %p55 = scmp.eq.s32.totalorder %s15, 0
    %p56 = por %p54, %p55
    %s57 = ssub.s32 %s16, %s28
    %p58 = scmp.eq.s32.totalorder %s57, 0
    %s60 = sadd.s32 %s59, 1
    %s61 = scalar_select %p58, %s59, %s60
    %p64 = pneg %p58
    %p65 = scmp.eq.s32.totalorder %s9, 1
    %p66 = por %p64, %p65
    %p67 = scmp.ne.s32.totalorder %s59, %s62
    %p68 = scmp.eq.s32.totalorder %s9, 0
    %p69 = por %p67, %p68
    %p70 = scmp.ne.s32.totalorder %s59, %s62
    %p71 = scmp.eq.s32.totalorder %s14, 1
    %p72 = por %p70, %p71
    %p73 = scmp.ne.s32.totalorder %s62, %s63
    %p74 = scmp.eq.s32.totalorder %s14, 0
    %p75 = por %p73, %p74
    %p76 = scmp.ne.s32.totalorder %s62, %s63
    %p77 = scmp.eq.s32.totalorder %s15, 1
    %p78 = por %p76, %p77
    %p80 = scmp.ne.s32.totalorder %s63, %s79
    %p81 = scmp.eq.s32.totalorder %s15, 0
    %p82 = por %p80, %p81
    %s83 = ssub.s32 %s16, %s28
    %p84 = scmp.eq.s32.totalorder %s83, 0
    %s86 = sadd.s32 %s85, 1
    %s87 = scalar_select %p84, %s85, %s86
    %p90 = pneg %p84
    %p91 = scmp.eq.s32.totalorder %s9, 1
    %p92 = por %p90, %p91
    %p93 = scmp.ne.s32.totalorder %s85, %s88
    %p94 = scmp.eq.s32.totalorder %s9, 0
    %p95 = por %p93, %p94
    %p96 = scmp.ne.s32.totalorder %s85, %s88
    %p97 = scmp.eq.s32.totalorder %s14, 1
    %p98 = por %p96, %p97
    %p99 = scmp.ne.s32.totalorder %s88, %s89
    %p100 = scmp.eq.s32.totalorder %s14, 0
    %p101 = por %p99, %p100
    %p102 = scmp.ne.s32.totalorder %s88, %s89
    %p103 = scmp.eq.s32.totalorder %s15, 1
    %p104 = por %p102, %p103
    %p106 = scmp.ne.s32.totalorder %s89, %s105
    %p107 = scmp.eq.s32.totalorder %s15, 0
    %p108 = por %p106, %p107
    %s109 = ssub.s32 %s16, %s28
    %s110 = ssub.s32 %s17, %s24
    %s111 = sor.u32 %s109, %s110
    %p112 = scmp.eq.s32.totalorder %s111, 0
    %s114 = sadd.s32 %s113, 1
    %s115 = scalar_select %p112, %s113, %s114
    %p118 = pneg %p112
    %p119 = scmp.eq.s32.totalorder %s9, 1
    %p120 = por %p118, %p119
    %p121 = scmp.ne.s32.totalorder %s113, %s116
    %p122 = scmp.eq.s32.totalorder %s9, 0
    %p123 = por %p121, %p122
    %p124 = scmp.ne.s32.totalorder %s113, %s116
    %p125 = scmp.eq.s32.totalorder %s14, 1
    %p126 = por %p124, %p125
    %p127 = scmp.ne.s32.totalorder %s116, %s117
    %p128 = scmp.eq.s32.totalorder %s14, 0
    %p129 = por %p127, %p128
    %p130 = scmp.ne.s32.totalorder %s116, %s117
    %p131 = scmp.eq.s32.totalorder %s15, 1
    %p132 = por %p130, %p131
    %p134 = scmp.ne.s32.totalorder %s117, %s133
    %p135 = scmp.eq.s32.totalorder %s15, 0
    %p136 = por %p134, %p135
    %p137 = scmp.le.s32.totalorder 1, %s9
    %p138 = scmp.lt.s32.totalorder %s9, 3
    %p139 = pnand %p137, %p138
    %p140 = pneg %p139
    // Predicated region
    $region9: #{scaled_dot_product_attention.1} parent=5 // pred_check
      _
    $region10: #{scaled_dot_product_attention.1} parent=5 // pred_check_branch
      %142 = sbr.rel (%p139) target = $region12
    $region11: #{scaled_dot_product_attention.1} parent=5 // pred_region
      %s143 = ssub.s32 %s9, 1
    $region12: #{scaled_dot_product_attention.1} parent=5 // pred_fallthru
      _
    %p144 = scmp.lt.s32.totalorder %s9, 2
    // Predicated region
    $region13: #{scaled_dot_product_attention.1} parent=5 // pred_check
      %p145 = pneg %p144
    $region14: #{scaled_dot_product_attention.1} parent=5 // pred_check_branch
      %147 = sbr.rel (%p145) target = $region16
    $region15: #{scaled_dot_product_attention.1} parent=5 // pred_region
      // Predicated region
      $region17: #{scaled_dot_product_attention.1} parent=15 // pred_check
        %p148 = pneg %p43
      $region18: #{scaled_dot_product_attention.1} parent=15 // pred_check_branch
        %150 = sbr.rel (%p148) target = $region20
      $region19: #{scaled_dot_product_attention.1} parent=15 // pred_region
        %s151 = smul.u32 12, %s17
        %p152 = scmp.lt.s32.totalorder %s16, 1
        %s153 = scalar_select %p152, %s16, 1
        %p154 = scmp.lt.s32.totalorder %s151, 11
        %s155 = scalar_select %p154, %s151, 11
        %s156 = smul.addr %s153, 24
        %s157 = sadd.s32 %s155, %s156
        %s158 = smul.addr %s157, 8
        %s159 = scalar_lea.vmem %s0, %s158
        %s160 = smul.u32 12, %s17
      $region20: #{scaled_dot_product_attention.1} parent=15 // pred_fallthru
        _
      // Predicated region
      $region21: #{scaled_dot_product_attention.1} parent=15 // pred_check
        %p161 = pneg %p69
      $region22: #{scaled_dot_product_attention.1} parent=15 // pred_check_branch
        %163 = sbr.rel (%p161) target = $region24
      $region23: #{scaled_dot_product_attention.1} parent=15 // pred_region
        %p164 = scmp.lt.s32.totalorder %s16, 1
        %s165 = scalar_select %p164, %s16, 1
        %s166 = smul.addr %s165, 16
        %s167 = smul.addr %s166, 8
        %s168 = scalar_lea.vmem %s1, %s167
      $region24: #{scaled_dot_product_attention.1} parent=15 // pred_fallthru
        _
      // Predicated region
      $region25: #{scaled_dot_product_attention.1} parent=15 // pred_check
        %p169 = pneg %p95
      $region26: #{scaled_dot_product_attention.1} parent=15 // pred_check_branch
        %171 = sbr.rel (%p169) target = $region28
      $region27: #{scaled_dot_product_attention.1} parent=15 // pred_region
        %p172 = scmp.lt.s32.totalorder %s16, 1
        %s173 = scalar_select %p172, %s16, 1
        %s174 = smul.addr %s173, 16
        %s175 = smul.addr %s174, 8
        %s176 = scalar_lea.vmem %s2, %s175
      $region28: #{scaled_dot_product_attention.1} parent=15 // pred_fallthru
        _
    $region16: #{scaled_dot_product_attention.1} parent=5 // pred_fallthru
      _
    %p177 = scmp.le.s32.totalorder 1, %s9
    %p178 = scmp.lt.s32.totalorder %s9, 3
    %p179 = pnand %p177, %p178
    %p180 = pneg %p179
    // Predicated region
    $region29: #{scaled_dot_product_attention.1} parent=5 // pred_check
      _
    $region30: #{scaled_dot_product_attention.1} parent=5 // pred_check_branch
      %182 = sbr.rel (%p179) target = $region32
    $region31: #{scaled_dot_product_attention.1} parent=5 // pred_region
      %s183 = ssub.s32 %s9, 1
      %s184 = smul.u32 12, %s19
      %p185 = scmp.lt.s32.totalorder %s18, 1
      %s186 = scalar_select %p185, %s18, 1
      %p187 = scmp.lt.s32.totalorder %s184, 11
      %s188 = scalar_select %p187, %s184, 11
      %s189 = smul.addr %s186, 24
      %s190 = sadd.s32 %s188, %s189
      %s191 = smul.addr %s190, 8
      %s192 = scalar_lea.vmem %s0, %s191
      %p193 = pneg %p49
      %p194 = pneg %p46
      %p195 = scmp.lt.s32.totalorder %s18, 1
      %s196 = scalar_select %p195, %s18, 1
      %s197 = smul.addr %s196, 16
      %s198 = smul.addr %s197, 8
      %s199 = scalar_lea.vmem %s1, %s198
      %p200 = pneg %p75
      %p201 = pneg %p72
      %p202 = scmp.lt.s32.totalorder %s18, 1
      %s203 = scalar_select %p202, %s18, 1
      %s204 = smul.addr %s203, 16
      %s205 = smul.addr %s204, 8
      %s206 = scalar_lea.vmem %s2, %s205
      %p207 = pneg %p101
      %p208 = pneg %p98
      %p209 = pneg %p129
      %p210 = pneg %p126
      %s211 = smul.u32 12, %s19
      %p212 = scmp.lt.s32.totalorder %s18, 1
      %s213 = scalar_select %p212, %s18, 1
      %p214 = scmp.lt.s32.totalorder %s211, 11
      %s215 = scalar_select %p214, %s211, 11
      %s216 = smul.addr %s213, 24
      %s217 = sadd.s32 %s215, %s216
      %s218 = smul.addr %s217, 8
      %s219 = scalar_lea.vmem %s3, %s218
      %s220 = smul.u32 12, %s19
      %p221 = scmp.lt.s32.totalorder %s18, 1
      %s222 = scalar_select %p221, %s18, 1
      %p223 = scmp.lt.s32.totalorder %s220, 11
      %s224 = scalar_select %p223, %s220, 11
      %s225 = smul.addr %s222, 24
      %s226 = sadd.s32 %s224, %s225
      %s227 = smul.addr %s226, 8
      %s228 = scalar_lea.vmem %s0, %s227
      %s229 = smul.u32 12, %s19
      %p230 = scmp.lt.s32.totalorder %s18, 1
      %s231 = scalar_select %p230, %s18, 1
      %s232 = smul.addr %s231, 16
      %s233 = smul.addr %s232, 8
      %s234 = scalar_lea.vmem %s1, %s233
      %p235 = scmp.lt.s32.totalorder %s18, 1
      %s236 = scalar_select %p235, %s18, 1
      %s237 = smul.addr %s236, 16
      %s238 = smul.addr %s237, 8
      %s239 = scalar_lea.vmem %s2, %s238
      %s240 = smul.u32 12, %s19
      %p241 = scmp.lt.s32.totalorder %s18, 1
      %s242 = scalar_select %p241, %s18, 1
      %p243 = scmp.lt.s32.totalorder %s240, 11
      %s244 = scalar_select %p243, %s240, 11
      %s245 = smul.addr %s242, 24
      %s246 = sadd.s32 %s244, %s245
      %s247 = smul.addr %s246, 8
      %s248 = scalar_lea.vmem %s3, %s247
      %s249 = smul.u32 12, %s19
      %v250 = vld [vmem:[%s228] sm:$0xff]
      %v251 = vld [vmem:[%s228 + $0x8] sm:$0xff]
      %v252 = vld [vmem:[%s228 + $0x10] sm:$0xff]
      %v253 = vld [vmem:[%s228 + $0x18] sm:$0xff]
      %v254 = vld [vmem:[%s228 + $0x20] sm:$0xff]
      %v255 = vld [vmem:[%s228 + $0x28] sm:$0xff]
      %v256 = vld [vmem:[%s228 + $0x30] sm:$0xff]
      %v257 = vld [vmem:[%s228 + $0x38] sm:$0xff]
      %v258 = vld [vmem:[%s228 + $0x40] sm:$0xff]
      %v259 = vld [vmem:[%s228 + $0x48] sm:$0xff]
      %v260 = vld [vmem:[%s228 + $0x50] sm:$0xff]
      %v261 = vld [vmem:[%s228 + $0x58] sm:$0xf]
      %v262 = vld [vmem:[%s228 + $0x60] sm:$0xff]
      %v263 = vld [vmem:[%s228 + $0x68] sm:$0xff]
      %v264 = vld [vmem:[%s228 + $0x70] sm:$0xff]
      %v265 = vld [vmem:[%s228 + $0x78] sm:$0xff]
      %v266 = vld [vmem:[%s228 + $0x80] sm:$0xff]
      %v267 = vld [vmem:[%s228 + $0x88] sm:$0xff]
      %v268 = vld [vmem:[%s228 + $0x90] sm:$0xff]
      %v269 = vld [vmem:[%s228 + $0x98] sm:$0xff]
      %v270 = vld [vmem:[%s228 + $0xa0] sm:$0xff]
      %v271 = vld [vmem:[%s228 + $0xa8] sm:$0xff]
      %v272 = vld [vmem:[%s228 + $0xb0] sm:$0xff]
      %v273 = vld [vmem:[%s228 + $0xb8] sm:$0xf]
      %v274 = vld [vmem:[%s234] sm:$0xff]
      %v275 = vld [vmem:[%s234 + $0x8] sm:$0xff]
      %v276 = vld [vmem:[%s234 + $0x10] sm:$0xff]
      %v277 = vld [vmem:[%s234 + $0x18] sm:$0xff]
      %v278 = vld [vmem:[%s234 + $0x20] sm:$0xff]
      %v279 = vld [vmem:[%s234 + $0x28] sm:$0xff]
      %v280 = vld [vmem:[%s234 + $0x30] sm:$0xff]
      %v281 = vld [vmem:[%s234 + $0x38] sm:$0xff]
      %v282 = vld [vmem:[%s234 + $0x40] sm:$0xff]
      %v283 = vld [vmem:[%s234 + $0x48] sm:$0xff]
      %v284 = vld [vmem:[%s234 + $0x50] sm:$0xff]
      %v285 = vld [vmem:[%s234 + $0x58] sm:$0xff]
      %v286 = vld [vmem:[%s234 + $0x60] sm:$0xff]
      %v287 = vld [vmem:[%s234 + $0x68] sm:$0xff]
      %v288 = vld [vmem:[%s234 + $0x70] sm:$0xff]
      %v289 = vld [vmem:[%s234 + $0x78] sm:$0xff]
      %v290 = vld [vmem:[%s239] sm:$0xff]
      %v291 = vld [vmem:[%s239 + $0x8] sm:$0xff]
      %v292 = vld [vmem:[%s239 + $0x10] sm:$0xff]
      %v293 = vld [vmem:[%s239 + $0x18] sm:$0xff]
      %v294 = vld [vmem:[%s239 + $0x20] sm:$0xff]
      %v295 = vld [vmem:[%s239 + $0x28] sm:$0xff]
      %v296 = vld [vmem:[%s239 + $0x30] sm:$0xff]
      %v297 = vld [vmem:[%s239 + $0x38] sm:$0xff]
      %v298 = vld [vmem:[%s239 + $0x40] sm:$0xff]
      %v299 = vld [vmem:[%s239 + $0x48] sm:$0xff]
      %v300 = vld [vmem:[%s239 + $0x50] sm:$0xff]
      %v301 = vld [vmem:[%s239 + $0x58] sm:$0xff]
      %v302 = vld [vmem:[%s239 + $0x60] sm:$0xff]
      %v303 = vld [vmem:[%s239 + $0x68] sm:$0xff]
      %v304 = vld [vmem:[%s239 + $0x70] sm:$0xff]
      %v305 = vld [vmem:[%s239 + $0x78] sm:$0xff]
      %vm306 = vcmask 64512
      %v308 = vsel %vm306, %v250, 0
      %v311 = vsel %vm306, %v251, 0
      %v314 = vsel %vm306, %v252, 0
      %v317 = vsel %vm306, %v253, 0
      %v320 = vsel %vm306, %v254, 0
      %v323 = vsel %vm306, %v255, 0
      %v326 = vsel %vm306, %v256, 0
      %v329 = vsel %vm306, %v257, 0
      %v332 = vsel %vm306, %v258, 0
      %v335 = vsel %vm306, %v259, 0
      %v338 = vsel %vm306, %v260, 0
      %v341 = vsel %vm306, %v261, 0
      %v344 = vsel %vm306, %v274, 0
      %v347 = vsel %vm306, %v275, 0
      %v350 = vsel %vm306, %v276, 0
      %v353 = vsel %vm306, %v277, 0
      %v356 = vsel %vm306, %v278, 0
      %v359 = vsel %vm306, %v279, 0
      %v362 = vsel %vm306, %v280, 0
      %v365 = vsel %vm306, %v281, 0
      %367 = vmatprep.subr.mxu0 0.0
      %368 = vmatpush1.xpose.msra.mxu0 %v344
      %369 = vmatprep.subr.mxu0 0.0
      %370 = vmatpush1.xpose.msra.mxu0 %v347
      %371 = vmatprep.subr.mxu0 0.0
      %372 = vmatpush1.xpose.msra.mxu0 %v350
      %373 = vmatprep.subr.mxu0 0.0
      %374 = vmatpush1.xpose.msra.mxu0 %v353
      %375 = vmatprep.subr.mxu0 0.0
      %376 = vmatpush1.xpose.msra.mxu0 %v356
      %377 = vmatprep.subr.mxu0 0.0
      %378 = vmatpush1.xpose.msra.mxu0 %v359
      %379 = vmatprep.subr.mxu0 0.0
      %380 = vmatpush1.xpose.msra.mxu0 %v362
      %381 = vmatprep.subr.mxu0 0.0
      %382 = vmatpush1.xpose.msra.mxu0 %v365
      %383 = vmatprep.subr.mxu0 0.0
      %384 = vmatpush1.xpose.msra.mxu0 0.0
      %385 = vmatprep.subr.mxu0 0.0
      %386 = vmatpush1.xpose.msra.mxu0 0.0
      %387 = vmatprep.subr.mxu0 0.0
      %388 = vmatpush1.xpose.msra.mxu0 0.0
      %389 = vmatprep.subr.mxu0 0.0
      %390 = vmatpush1.xpose.msra.mxu0 0.0
      %391 = vmatprep.subr.mxu0 0.0
      %392 = vmatpush1.xpose.msra.mxu0 0.0
      %393 = vmatprep.subr.mxu0 0.0
      %394 = vmatpush1.xpose.msra.mxu0 0.0
      %395 = vmatprep.subr.mxu0 0.0
      %396 = vmatpush1.xpose.msra.mxu0 0.0
      %397 = vmatprep.subr.mxu0 0.0
      %398 = vmatpush1.xpose.msra.mxu0 0.0
      %399 = vmatprep.subr.mxu0 0.0
      %400 = vmatpush1.xpose.msra.mxu0 0.0
      %401 = vmatprep.subr.mxu0 0.0
      %402 = vmatpush1.xpose.msra.mxu0 0.0
      %403 = vmatprep.subr.mxu0 0.0
      %404 = vmatpush1.xpose.msra.mxu0 0.0
      %405 = vmatprep.subr.mxu0 0.0
      %406 = vmatpush1.xpose.msra.mxu0 0.0
      %407 = vmatprep.subr.mxu0 0.0
      %408 = vmatpush1.xpose.msra.mxu0 0.0
      %409 = vmatprep.subr.mxu0 0.0
      %410 = vmatpush1.xpose.msra.mxu0 0.0
      %411 = vmatprep.subr.mxu0 0.0
      %412 = vmatpush1.xpose.msra.mxu0 0.0
      %413 = vmatprep.subr.mxu0 0.0
      %414 = vmatpush1.xpose.msra.mxu0 0.0
      %415 = vmatprep.subr.mxu0 0.0
      %416 = vmatpush1.xpose.msra.mxu0 0.0
      %417 = vmatprep.subr.mxu0 0.0
      %418 = vmatpush1.xpose.msra.mxu0 0.0
      %419 = vmatprep.subr.mxu0 0.0
      %420 = vmatpush1.xpose.msra.mxu0 0.0
      %421 = vmatprep.subr.mxu0 0.0
      %422 = vmatpush1.xpose.msra.mxu0 0.0
      %423 = vmatprep.subr.mxu0 0.0
      %424 = vmatpush1.xpose.msra.mxu0 0.0
      %425 = vmatprep.subr.mxu0 0.0
      %426 = vmatpush1.xpose.msra.mxu0 0.0
      %427 = vmatprep.subr.mxu0 0.0
      %428 = vmatpush1.xpose.msra.mxu0 0.0
      %429 = vmatprep.subr.mxu0 0.0
      %430 = vmatpush1.xpose.msra.mxu0 0.0
      %431 = vmatprep.mubr.f32.mxu0 0.0
      %432 = vmatmul.mubr.f32.gmra.mrb[0].mxu0 %v308
      %v433 = vpop.f32.mrb[0].mxu0
      %v434 = vadd.f32 0.0, %v433
      %v435 = vpop.f32.mrb[0].mxu0
      %436 = vmatprep.mubr.f32.mxu0 0.0
      %437 = vmatmul.mubr.f32.gmra.mrb[0].mxu0 %v311
      %v438 = vpop.f32.mrb[0].mxu0
      %v439 = vadd.f32 0.0, %v438
      %v440 = vpop.f32.mrb[0].mxu0
      %441 = vmatprep.mubr.f32.mxu0 0.0
      %442 = vmatmul.mubr.f32.gmra.mrb[0].mxu0 %v314
      %v443 = vpop.f32.mrb[0].mxu0
      %v444 = vadd.f32 0.0, %v443
      %v445 = vpop.f32.mrb[0].mxu0
      %446 = vmatprep.mubr.f32.mxu0 0.0
      %447 = vmatmul.mubr.f32.gmra.mrb[0].mxu0 %v317
      %v448 = vpop.f32.mrb[0].mxu0
      %v449 = vadd.f32 0.0, %v448
      %v450 = vpop.f32.mrb[0].mxu0
      %451 = vmatprep.mubr.f32.mxu0 0.0
      %452 = vmatmul.mubr.f32.gmra.mrb[0].mxu0 %v320
      %v453 = vpop.f32.mrb[0].mxu0
      %v454 = vadd.f32 0.0, %v453
      %v455 = vpop.f32.mrb[0].mxu0
      %456 = vmatprep.mubr.f32.mxu0 0.0
      %457 = vmatmul.mubr.f32.gmra.mrb[0].mxu0 %v323
      %v458 = vpop.f32.mrb[0].mxu0
      %v459 = vadd.f32 0.0, %v458
      %v460 = vpop.f32.mrb[0].mxu0
      %461 = vmatprep.mubr.f32.mxu0 0.0
      %462 = vmatmul.mubr.f32.gmra.mrb[0].mxu0 %v326
      %v463 = vpop.f32.mrb[0].mxu0
      %v464 = vadd.f32 0.0, %v463
      %v465 = vpop.f32.mrb[0].mxu0
      %466 = vmatprep.mubr.f32.mxu0 0.0
      %467 = vmatmul.mubr.f32.gmra.mrb[0].mxu0 %v329
      %v468 = vpop.f32.mrb[0].mxu0
      %v469 = vadd.f32 0.0, %v468
      %v470 = vpop.f32.mrb[0].mxu0
      %471 = vmatprep.mubr.f32.mxu0 0.0
      %472 = vmatmul.mubr.f32.gmra.mrb[0].mxu0 %v332
      %v473 = vpop.f32.mrb[0].mxu0
      %v474 = vadd.f32 0.0, %v473
      %v475 = vpop.f32.mrb[0].mxu0
      %476 = vmatprep.mubr.f32.mxu0 0.0
      %477 = vmatmul.mubr.f32.gmra.mrb[0].mxu0 %v335
      %v478 = vpop.f32.mrb[0].mxu0
      %v479 = vadd.f32 0.0, %v478
      %v480 = vpop.f32.mrb[0].mxu0
      %481 = vmatprep.mubr.f32.mxu0 0.0
      %482 = vmatmul.mubr.f32.gmra.mrb[0].mxu0 %v338
      %v483 = vpop.f32.mrb[0].mxu0
      %v484 = vadd.f32 0.0, %v483
      %v485 = vpop.f32.mrb[0].mxu0
      %486 = vmatprep.mubr.f32.mxu0 0.0
      %487 = vmatmul.mubr.f32.gmra.mrb[0].mxu0 %v341
      %v488 = vpop.f32.mrb[0].mxu0
      %v489 = vadd.f32 0.0, %v488
      %v490 = vpop.f32.mrb[0].mxu0
      %491 = vdwg.mxu0
      %v493 = vsel %vm306, %v262, 0
      %v496 = vsel %vm306, %v263, 0
      %v499 = vsel %vm306, %v264, 0
      %v502 = vsel %vm306, %v265, 0
      %v505 = vsel %vm306, %v266, 0
      %v508 = vsel %vm306, %v267, 0
      %v511 = vsel %vm306, %v268, 0
      %v514 = vsel %vm306, %v269, 0
      %v517 = vsel %vm306, %v270, 0
      %v520 = vsel %vm306, %v271, 0
      %v523 = vsel %vm306, %v272, 0
      %v526 = vsel %vm306, %v273, 0
      %v529 = vsel %vm306, %v282, 0
      %v532 = vsel %vm306, %v283, 0
      %v535 = vsel %vm306, %v284, 0
      %v538 = vsel %vm306, %v285, 0
      %v541 = vsel %vm306, %v286, 0
      %v544 = vsel %vm306, %v287, 0
      %v547 = vsel %vm306, %v288, 0
      %v550 = vsel %vm306, %v289, 0
      %552 = vmatprep.subr.mxu0 0.0
      %553 = vmatpush1.xpose.msra.mxu0 %v529
      %554 = vmatprep.subr.mxu0 0.0
      %555 = vmatpush1.xpose.msra.mxu0 %v532
      %556 = vmatprep.subr.mxu0 0.0
      %557 = vmatpush1.xpose.msra.mxu0 %v535
      %558 = vmatprep.subr.mxu0 0.0
      %559 = vmatpush1.xpose.msra.mxu0 %v538
      %560 = vmatprep.subr.mxu0 0.0
      %561 = vmatpush1.xpose.msra.mxu0 %v541
      %562 = vmatprep.subr.mxu0 0.0
      %563 = vmatpush1.xpose.msra.mxu0 %v544
      %564 = vmatprep.subr.mxu0 0.0
      %565 = vmatpush1.xpose.msra.mxu0 %v547
      %566 = vmatprep.subr.mxu0 0.0
      %567 = vmatpush1.xpose.msra.mxu0 %v550
      %568 = vmatprep.subr.mxu0 0.0
      %569 = vmatpush1.xpose.msra.mxu0 0.0
      %570 = vmatprep.subr.mxu0 0.0
      %571 = vmatpush1.xpose.msra.mxu0 0.0
      %572 = vmatprep.subr.mxu0 0.0
      %573 = vmatpush1.xpose.msra.mxu0 0.0
      %574 = vmatprep.subr.mxu0 0.0
      %575 = vmatpush1.xpose.msra.mxu0 0.0
      %576 = vmatprep.subr.mxu0 0.0
      %577 = vmatpush1.xpose.msra.mxu0 0.0
      %578 = vmatprep.subr.mxu0 0.0
      %579 = vmatpush1.xpose.msra.mxu0 0.0
      %580 = vmatprep.subr.mxu0 0.0
      %581 = vmatpush1.xpose.msra.mxu0 0.0
      %582 = vmatprep.subr.mxu0 0.0
      %583 = vmatpush1.xpose.msra.mxu0 0.0
      %584 = vmatprep.subr.mxu0 0.0
      %585 = vmatpush1.xpose.msra.mxu0 0.0
      %586 = vmatprep.subr.mxu0 0.0
      %587 = vmatpush1.xpose.msra.mxu0 0.0
      %588 = vmatprep.subr.mxu0 0.0
      %589 = vmatpush1.xpose.msra.mxu0 0.0
      %590 = vmatprep.subr.mxu0 0.0
      %591 = vmatpush1.xpose.msra.mxu0 0.0
      %592 = vmatprep.subr.mxu0 0.0
      %593 = vmatpush1.xpose.msra.mxu0 0.0
      %594 = vmatprep.subr.mxu0 0.0
      %595 = vmatpush1.xpose.msra.mxu0 0.0
      %596 = vmatprep.subr.mxu0 0.0
      %597 = vmatpush1.xpose.msra.mxu0 0.0
      %598 = vmatprep.subr.mxu0 0.0
      %599 = vmatpush1.xpose.msra.mxu0 0.0
      %600 = vmatprep.subr.mxu0 0.0
      %601 = vmatpush1.xpose.msra.mxu0 0.0
      %602 = vmatprep.subr.mxu0 0.0
      %603 = vmatpush1.xpose.msra.mxu0 0.0
      %604 = vmatprep.subr.mxu0 0.0
      %605 = vmatpush1.xpose.msra.mxu0 0.0
      %606 = vmatprep.subr.mxu0 0.0
      %607 = vmatpush1.xpose.msra.mxu0 0.0
      %608 = vmatprep.subr.mxu0 0.0
      %609 = vmatpush1.xpose.msra.mxu0 0.0
      %610 = vmatprep.subr.mxu0 0.0
      %611 = vmatpush1.xpose.msra.mxu0 0.0
      %612 = vmatprep.subr.mxu0 0.0
      %613 = vmatpush1.xpose.msra.mxu0 0.0
      %614 = vmatprep.subr.mxu0 0.0
      %615 = vmatpush1.xpose.msra.mxu0 0.0
      %616 = vmatprep.mubr.f32.mxu0 0.0
      %617 = vmatmul.mubr.f32.gmra.mrb[0].mxu0 %v493
      %v618 = vpop.f32.mrb[0].mxu0
      %v619 = vadd.f32 0.0, %v618
      %v620 = vpop.f32.mrb[0].mxu0
      %621 = vmatprep.mubr.f32.mxu0 0.0
      %622 = vmatmul.mubr.f32.gmra.mrb[0].mxu0 %v496
      %v623 = vpop.f32.mrb[0].mxu0
      %v624 = vadd.f32 0.0, %v623
      %v625 = vpop.f32.mrb[0].mxu0
      %626 = vmatprep.mubr.f32.mxu0 0.0
      %627 = vmatmul.mubr.f32.gmra.mrb[0].mxu0 %v499
      %v628 = vpop.f32.mrb[0].mxu0
      %v629 = vadd.f32 0.0, %v628
      %v630 = vpop.f32.mrb[0].mxu0
      %631 = vmatprep.mubr.f32.mxu0 0.0
      %632 = vmatmul.mubr.f32.gmra.mrb[0].mxu0 %v502
      %v633 = vpop.f32.mrb[0].mxu0
      %v634 = vadd.f32 0.0, %v633
      %v635 = vpop.f32.mrb[0].mxu0
      %636 = vmatprep.mubr.f32.mxu0 0.0
      %637 = vmatmul.mubr.f32.gmra.mrb[0].mxu0 %v505
      %v638 = vpop.f32.mrb[0].mxu0
      %v639 = vadd.f32 0.0, %v638
      %v640 = vpop.f32.mrb[0].mxu0
      %641 = vmatprep.mubr.f32.mxu0 0.0
      %642 = vmatmul.mubr.f32.gmra.mrb[0].mxu0 %v508
      %v643 = vpop.f32.mrb[0].mxu0
      %v644 = vadd.f32 0.0, %v643
      %v645 = vpop.f32.mrb[0].mxu0
      %646 = vmatprep.mubr.f32.mxu0 0.0
      %647 = vmatmul.mubr.f32.gmra.mrb[0].mxu0 %v511
      %v648 = vpop.f32.mrb[0].mxu0
      %v649 = vadd.f32 0.0, %v648
      %v650 = vpop.f32.mrb[0].mxu0
      %651 = vmatprep.mubr.f32.mxu0 0.0
      %652 = vmatmul.mubr.f32.gmra.mrb[0].mxu0 %v514
      %v653 = vpop.f32.mrb[0].mxu0
      %v654 = vadd.f32 0.0, %v653
      %v655 = vpop.f32.mrb[0].mxu0
      %656 = vmatprep.mubr.f32.mxu0 0.0
      %657 = vmatmul.mubr.f32.gmra.mrb[0].mxu0 %v517
      %v658 = vpop.f32.mrb[0].mxu0
      %v659 = vadd.f32 0.0, %v658
      %v660 = vpop.f32.mrb[0].mxu0
      %661 = vmatprep.mubr.f32.mxu0 0.0
      %662 = vmatmul.mubr.f32.gmra.mrb[0].mxu0 %v520
      %v663 = vpop.f32.mrb[0].mxu0
      %v664 = vadd.f32 0.0, %v663
      %v665 = vpop.f32.mrb[0].mxu0
      %666 = vmatprep.mubr.f32.mxu0 0.0
      %667 = vmatmul.mubr.f32.gmra.mrb[0].mxu0 %v523
      %v668 = vpop.f32.mrb[0].mxu0
      %v669 = vadd.f32 0.0, %v668
      %v670 = vpop.f32.mrb[0].mxu0
      %671 = vmatprep.mubr.f32.mxu0 0.0
      %672 = vmatmul.mubr.f32.gmra.mrb[0].mxu0 %v526
      %v673 = vpop.f32.mrb[0].mxu0
      %v674 = vadd.f32 0.0, %v673
      %v675 = vpop.f32.mrb[0].mxu0
      %676 = vdwg.mxu0
      %v677 = vmul.f32 %v434, 0.35355338
      %v678 = vmul.f32 %v439, 0.35355338
      %v679 = vmul.f32 %v444, 0.35355338
      %v680 = vmul.f32 %v449, 0.35355338
      %v681 = vmul.f32 %v454, 0.35355338
      %v682 = vmul.f32 %v459, 0.35355338
      %v683 = vmul.f32 %v464, 0.35355338
      %v684 = vmul.f32 %v469, 0.35355338
      %v685 = vmul.f32 %v474, 0.35355338
      %v686 = vmul.f32 %v479, 0.35355338
      %v687 = vmul.f32 %v484, 0.35355338
      %v688 = vmul.f32 %v489, 0.35355338
      %v689 = vmul.f32 %v619, 0.35355338
      %v690 = vmul.f32 %v624, 0.35355338
      %v691 = vmul.f32 %v629, 0.35355338
      %v692 = vmul.f32 %v634, 0.35355338
      %v693 = vmul.f32 %v639, 0.35355338
      %v694 = vmul.f32 %v644, 0.35355338
      %v695 = vmul.f32 %v649, 0.35355338
      %v696 = vmul.f32 %v654, 0.35355338
      %v697 = vmul.f32 %v659, 0.35355338
      %v698 = vmul.f32 %v664, 0.35355338
      %v699 = vmul.f32 %v669, 0.35355338
      %v700 = vmul.f32 %v674, 0.35355338
      %vm701 = vcmask 523264
      %v702 = vsel %vm701, %v677, -inf
      %703 = vmax.xlane.f32.xlu0 %v702
      %v704 = vpop.xlane.xlu0 %703
      %v705 = vsel %vm701, %v678, -inf
      %706 = vmax.xlane.f32.xlu0 %v705
      %v707 = vpop.xlane.xlu0 %706
      %v708 = vsel %vm701, %v679, -inf
      %709 = vmax.xlane.f32.xlu0 %v708
      %v710 = vpop.xlane.xlu0 %709
      %v711 = vsel %vm701, %v680, -inf
      %712 = vmax.xlane.f32.xlu0 %v711
      %v713 = vpop.xlane.xlu0 %712
      %v714 = vsel %vm701, %v681, -inf
      %715 = vmax.xlane.f32.xlu0 %v714
      %v716 = vpop.xlane.xlu0 %715
      %v717 = vsel %vm701, %v682, -inf
      %718 = vmax.xlane.f32.xlu0 %v717
      %v719 = vpop.xlane.xlu0 %718
      %v720 = vsel %vm701, %v683, -inf
      %721 = vmax.xlane.f32.xlu0 %v720
      %v722 = vpop.xlane.xlu0 %721
      %v723 = vsel %vm701, %v684, -inf
      %724 = vmax.xlane.f32.xlu0 %v723
      %v725 = vpop.xlane.xlu0 %724
      %v726 = vsel %vm701, %v685, -inf
      %727 = vmax.xlane.f32.xlu0 %v726
      %v728 = vpop.xlane.xlu0 %727
      %v729 = vsel %vm701, %v686, -inf
      %730 = vmax.xlane.f32.xlu0 %v729
      %v731 = vpop.xlane.xlu0 %730
      %v732 = vsel %vm701, %v687, -inf
      %733 = vmax.xlane.f32.xlu0 %v732
      %v734 = vpop.xlane.xlu0 %733
      %vm735 = vcmask 519168
      %v736 = vsel %vm735, %v688, -inf
      %737 = vmax.xlane.f32.xlu0 %v736
      %v738 = vpop.xlane.xlu0 %737
      %v739 = vsel %vm701, %v689, -inf
      %740 = vmax.xlane.f32.xlu0 %v739
      %v741 = vpop.xlane.xlu0 %740
      %v742 = vsel %vm701, %v690, -inf
      %743 = vmax.xlane.f32.xlu0 %v742
      %v744 = vpop.xlane.xlu0 %743
      %v745 = vsel %vm701, %v691, -inf
      %746 = vmax.xlane.f32.xlu0 %v745
      %v747 = vpop.xlane.xlu0 %746
      %v748 = vsel %vm701, %v692, -inf
      %749 = vmax.xlane.f32.xlu0 %v748
      %v750 = vpop.xlane.xlu0 %749
      %v751 = vsel %vm701, %v693, -inf
      %752 = vmax.xlane.f32.xlu0 %v751
      %v753 = vpop.xlane.xlu0 %752
      %v754 = vsel %vm701, %v694, -inf
      %755 = vmax.xlane.f32.xlu0 %v754
      %v756 = vpop.xlane.xlu0 %755
      %v757 = vsel %vm701, %v695, -inf
      %758 = vmax.xlane.f32.xlu0 %v757
      %v759 = vpop.xlane.xlu0 %758
      %v760 = vsel %vm701, %v696, -inf
      %761 = vmax.xlane.f32.xlu0 %v760
      %v762 = vpop.xlane.xlu0 %761
      %v763 = vsel %vm701, %v697, -inf
      %764 = vmax.xlane.f32.xlu0 %v763
      %v765 = vpop.xlane.xlu0 %764
      %v766 = vsel %vm701, %v698, -inf
      %767 = vmax.xlane.f32.xlu0 %v766
      %v768 = vpop.xlane.xlu0 %767
      %v769 = vsel %vm701, %v699, -inf
      %770 = vmax.xlane.f32.xlu0 %v769
      %v771 = vpop.xlane.xlu0 %770
      %v772 = vsel %vm735, %v700, -inf
      %773 = vmax.xlane.f32.xlu0 %v772
      %v774 = vpop.xlane.xlu0 %773
      %v775 = vsub.f32 %v677, %v704
      %v776 = vsub.f32 %v678, %v707
      %v777 = vsub.f32 %v679, %v710
      %v778 = vsub.f32 %v680, %v713
      %v779 = vsub.f32 %v681, %v716
      %v780 = vsub.f32 %v682, %v719
      %v781 = vsub.f32 %v683, %v722
      %v782 = vsub.f32 %v684, %v725
      %v783 = vsub.f32 %v685, %v728
      %v784 = vsub.f32 %v686, %v731
      %v785 = vsub.f32 %v687, %v734
      %v786 = vsub.f32 %v688, %v738
      %v787 = vsub.f32 %v689, %v741
      %v788 = vsub.f32 %v690, %v744
      %v789 = vsub.f32 %v691, %v747
      %v790 = vsub.f32 %v692, %v750
      %v791 = vsub.f32 %v693, %v753
      %v792 = vsub.f32 %v694, %v756
      %v793 = vsub.f32 %v695, %v759
      %v794 = vsub.f32 %v696, %v762
      %v795 = vsub.f32 %v697, %v765
      %v796 = vsub.f32 %v698, %v768
      %v797 = vsub.f32 %v699, %v771
      %v798 = vsub.f32 %v700, %v774
      %v799 = vmul.f32 %v775, 1.442695
      %v800 = vpow.pop %v799
      %v801 = vmul.f32 %v776, 1.442695
      %v802 = vpow.pop %v801
      %v803 = vmul.f32 %v777, 1.442695
      %v804 = vpow.pop %v803
      %v805 = vmul.f32 %v778, 1.442695
      %v806 = vpow.pop %v805
      %v807 = vmul.f32 %v779, 1.442695
      %v808 = vpow.pop %v807
      %v809 = vmul.f32 %v780, 1.442695
      %v810 = vpow.pop %v809
      %v811 = vmul.f32 %v781, 1.442695
      %v812 = vpow.pop %v811
      %v813 = vmul.f32 %v782, 1.442695
      %v814 = vpow.pop %v813
      %v815 = vmul.f32 %v783, 1.442695
      %v816 = vpow.pop %v815
      %v817 = vmul.f32 %v784, 1.442695
      %v818 = vpow.pop %v817
      %v819 = vmul.f32 %v785, 1.442695
      %v820 = vpow.pop %v819
      %v821 = vmul.f32 %v786, 1.442695
      %v822 = vpow.pop %v821
      %v823 = vmul.f32 %v787, 1.442695
      %v824 = vpow.pop %v823
      %v825 = vmul.f32 %v788, 1.442695
      %v826 = vpow.pop %v825
      %v827 = vmul.f32 %v789, 1.442695
      %v828 = vpow.pop %v827
      %v829 = vmul.f32 %v790, 1.442695
      %v830 = vpow.pop %v829
      %v831 = vmul.f32 %v791, 1.442695
      %v832 = vpow.pop %v831
      %v833 = vmul.f32 %v792, 1.442695
      %v834 = vpow.pop %v833
      %v835 = vmul.f32 %v793, 1.442695
      %v836 = vpow.pop %v835
      %v837 = vmul.f32 %v794, 1.442695
      %v838 = vpow.pop %v837
      %v839 = vmul.f32 %v795, 1.442695
      %v840 = vpow.pop %v839
      %v841 = vmul.f32 %v796, 1.442695
      %v842 = vpow.pop %v841
      %v843 = vmul.f32 %v797, 1.442695
      %v844 = vpow.pop %v843
      %v845 = vmul.f32 %v798, 1.442695
      %v846 = vpow.pop %v845
      %v847 = vsel %vm701, %v800, 0.0
      %848 = vadd.xlane.f32.xlu0 %v847
      %v849 = vpop.xlane.xlu0 %848
      %v850 = vsel %vm701, %v802, 0.0
      %851 = vadd.xlane.f32.xlu0 %v850
      %v852 = vpop.xlane.xlu0 %851
      %v853 = vsel %vm701, %v804, 0.0
      %854 = vadd.xlane.f32.xlu0 %v853
      %v855 = vpop.xlane.xlu0 %854
      %v856 = vsel %vm701, %v806, 0.0
      %857 = vadd.xlane.f32.xlu0 %v856
      %v858 = vpop.xlane.xlu0 %857
      %v859 = vsel %vm701, %v808, 0.0
      %860 = vadd.xlane.f32.xlu0 %v859
      %v861 = vpop.xlane.xlu0 %860
      %v862 = vsel %vm701, %v810, 0.0
      %863 = vadd.xlane.f32.xlu0 %v862
      %v864 = vpop.xlane.xlu0 %863
      %v865 = vsel %vm701, %v812, 0.0
      %866 = vadd.xlane.f32.xlu0 %v865
      %v867 = vpop.xlane.xlu0 %866
      %v868 = vsel %vm701, %v814, 0.0
      %869 = vadd.xlane.f32.xlu0 %v868
      %v870 = vpop.xlane.xlu0 %869
      %v871 = vsel %vm701, %v816, 0.0
      %872 = vadd.xlane.f32.xlu0 %v871
      %v873 = vpop.xlane.xlu0 %872
      %v874 = vsel %vm701, %v818, 0.0
      %875 = vadd.xlane.f32.xlu0 %v874
      %v876 = vpop.xlane.xlu0 %875
      %v877 = vsel %vm701, %v820, 0.0
      %878 = vadd.xlane.f32.xlu0 %v877
      %v879 = vpop.xlane.xlu0 %878
      %v880 = vsel %vm735, %v822, 0.0
      %881 = vadd.xlane.f32.xlu0 %v880
      %v882 = vpop.xlane.xlu0 %881
      %v883 = vsel %vm701, %v824, 0.0
      %884 = vadd.xlane.f32.xlu0 %v883
      %v885 = vpop.xlane.xlu0 %884
      %v886 = vsel %vm701, %v826, 0.0
      %887 = vadd.xlane.f32.xlu0 %v886
      %v888 = vpop.xlane.xlu0 %887
      %v889 = vsel %vm701, %v828, 0.0
      %890 = vadd.xlane.f32.xlu0 %v889
      %v891 = vpop.xlane.xlu0 %890
      %v892 = vsel %vm701, %v830, 0.0
      %893 = vadd.xlane.f32.xlu0 %v892
      %v894 = vpop.xlane.xlu0 %893
      %v895 = vsel %vm701, %v832, 0.0
      %896 = vadd.xlane.f32.xlu0 %v895
      %v897 = vpop.xlane.xlu0 %896
      %v898 = vsel %vm701, %v834, 0.0
      %899 = vadd.xlane.f32.xlu0 %v898
      %v900 = vpop.xlane.xlu0 %899
      %v901 = vsel %vm701, %v836, 0.0
      %902 = vadd.xlane.f32.xlu0 %v901
      %v903 = vpop.xlane.xlu0 %902
      %v904 = vsel %vm701, %v838, 0.0
      %905 = vadd.xlane.f32.xlu0 %v904
      %v906 = vpop.xlane.xlu0 %905
      %v907 = vsel %vm701, %v840, 0.0
      %908 = vadd.xlane.f32.xlu0 %v907
      %v909 = vpop.xlane.xlu0 %908
      %v910 = vsel %vm701, %v842, 0.0
      %911 = vadd.xlane.f32.xlu0 %v910
      %v912 = vpop.xlane.xlu0 %911
      %v913 = vsel %vm701, %v844, 0.0
      %914 = vadd.xlane.f32.xlu0 %v913
      %v915 = vpop.xlane.xlu0 %914
      %v916 = vsel %vm735, %v846, 0.0
      %917 = vadd.xlane.f32.xlu0 %v916
      %v918 = vpop.xlane.xlu0 %917
      %v919 = vrcp.pop %v849
      %v920 = vrcp.pop %v852
      %v921 = vrcp.pop %v855
      %v922 = vrcp.pop %v858
      %v923 = vrcp.pop %v861
      %v924 = vrcp.pop %v864
      %v925 = vrcp.pop %v867
      %v926 = vrcp.pop %v870
      %v927 = vrcp.pop %v873
      %v928 = vrcp.pop %v876
      %v929 = vrcp.pop %v879
      %v930 = vrcp.pop %v882
      %v931 = vrcp.pop %v885
      %v932 = vrcp.pop %v888
      %v933 = vrcp.pop %v891
      %v934 = vrcp.pop %v894
      %v935 = vrcp.pop %v897
      %v936 = vrcp.pop %v900
      %v937 = vrcp.pop %v903
      %v938 = vrcp.pop %v906
      %v939 = vrcp.pop %v909
      %v940 = vrcp.pop %v912
      %v941 = vrcp.pop %v915
      %v942 = vrcp.pop %v918
      %v943 = vmul.f32 %v800, %v919
      %v944 = vmul.f32 %v802, %v920
      %v945 = vmul.f32 %v804, %v921
      %v946 = vmul.f32 %v806, %v922
      %v947 = vmul.f32 %v808, %v923
      %v948 = vmul.f32 %v810, %v924
      %v949 = vmul.f32 %v812, %v925
      %v950 = vmul.f32 %v814, %v926
      %v951 = vmul.f32 %v816, %v927
      %v952 = vmul.f32 %v818, %v928
      %v953 = vmul.f32 %v820, %v929
      %v954 = vmul.f32 %v822, %v930
      %v955 = vmul.f32 %v824, %v931
      %v956 = vmul.f32 %v826, %v932
      %v957 = vmul.f32 %v828, %v933
      %v958 = vmul.f32 %v830, %v934
      %v959 = vmul.f32 %v832, %v935
      %v960 = vmul.f32 %v834, %v936
      %v961 = vmul.f32 %v836, %v937
      %v962 = vmul.f32 %v838, %v938
      %v963 = vmul.f32 %v840, %v939
      %v964 = vmul.f32 %v842, %v940
      %v965 = vmul.f32 %v844, %v941
      %v966 = vmul.f32 %v846, %v942
      %v968 = vsel %vm701, %v943, 0
      %v971 = vsel %vm701, %v944, 0
      %v974 = vsel %vm701, %v945, 0
      %v977 = vsel %vm701, %v946, 0
      %v980 = vsel %vm701, %v947, 0
      %v983 = vsel %vm701, %v948, 0
      %v986 = vsel %vm701, %v949, 0
      %v989 = vsel %vm701, %v950, 0
      %v992 = vsel %vm701, %v951, 0
      %v995 = vsel %vm701, %v952, 0
      %v998 = vsel %vm701, %v953, 0
      %v1001 = vsel %vm701, %v954, 0
      %1003 = vmatprep.subr.mxu0 0.0
      %1004 = vmatpush1.msra.mxu0 %v290
      %1005 = vmatprep.subr.mxu0 0.0
      %1006 = vmatpush1.msra.mxu0 %v291
      %1007 = vmatprep.subr.mxu0 0.0
      %1008 = vmatpush1.msra.mxu0 %v292
      %1009 = vmatprep.subr.mxu0 0.0
      %1010 = vmatpush1.msra.mxu0 %v293
      %1011 = vmatprep.subr.mxu0 0.0
      %1012 = vmatpush1.msra.mxu0 %v294
      %1013 = vmatprep.subr.mxu0 0.0
      %1014 = vmatpush1.msra.mxu0 %v295
      %1015 = vmatprep.subr.mxu0 0.0
      %1016 = vmatpush1.msra.mxu0 %v296
      %1017 = vmatprep.subr.mxu0 0.0
      %1018 = vmatpush1.msra.mxu0 %v297
      %1019 = vmatprep.subr.mxu0 0.0
      %1020 = vmatpush1.msra.mxu0 0.0
      %1021 = vmatprep.subr.mxu0 0.0
      %1022 = vmatpush1.msra.mxu0 0.0
      %1023 = vmatprep.subr.mxu0 0.0
      %1024 = vmatpush1.msra.mxu0 0.0
      %1025 = vmatprep.subr.mxu0 0.0
      %1026 = vmatpush1.msra.mxu0 0.0
      %1027 = vmatprep.subr.mxu0 0.0
      %1028 = vmatpush1.msra.mxu0 0.0
      %1029 = vmatprep.subr.mxu0 0.0
      %1030 = vmatpush1.msra.mxu0 0.0
      %1031 = vmatprep.subr.mxu0 0.0
      %1032 = vmatpush1.msra.mxu0 0.0
      %1033 = vmatprep.subr.mxu0 0.0
      %1034 = vmatpush1.msra.mxu0 0.0
      %1035 = vmatprep.subr.mxu0 0.0
      %1036 = vmatpush1.msra.mxu0 0.0
      %1037 = vmatprep.subr.mxu0 0.0
      %1038 = vmatpush1.msra.mxu0 0.0
      %1039 = vmatprep.subr.mxu0 0.0
      %1040 = vmatpush1.msra.mxu0 0.0
      %1041 = vmatprep.subr.mxu0 0.0
      %1042 = vmatpush1.msra.mxu0 0.0
      %1043 = vmatprep.subr.mxu0 0.0
      %1044 = vmatpush1.msra.mxu0 0.0
      %1045 = vmatprep.subr.mxu0 0.0
      %1046 = vmatpush1.msra.mxu0 0.0
      %1047 = vmatprep.subr.mxu0 0.0
      %1048 = vmatpush1.msra.mxu0 0.0
      %1049 = vmatprep.subr.mxu0 0.0
      %1050 = vmatpush1.msra.mxu0 0.0
      %1051 = vmatprep.subr.mxu0 0.0
      %1052 = vmatpush1.msra.mxu0 0.0
      %1053 = vmatprep.subr.mxu0 0.0
      %1054 = vmatpush1.msra.mxu0 0.0
      %1055 = vmatprep.subr.mxu0 0.0
      %1056 = vmatpush1.msra.mxu0 0.0
      %1057 = vmatprep.subr.mxu0 0.0
      %1058 = vmatpush1.msra.mxu0 0.0
      %1059 = vmatprep.subr.mxu0 0.0
      %1060 = vmatpush1.msra.mxu0 0.0
      %1061 = vmatprep.subr.mxu0 0.0
      %1062 = vmatpush1.msra.mxu0 0.0
      %1063 = vmatprep.subr.mxu0 0.0
      %1064 = vmatpush1.msra.mxu0 0.0
      %1065 = vmatprep.subr.mxu0 0.0
      %1066 = vmatpush1.msra.mxu0 0.0
      %1067 = vmatprep.mubr.f32.mxu0 0.0
      %1068 = vmatmul.mubr.f32.gmra.mrb[0].mxu0 %v968
      %v1069 = vpop.f32.mrb[0].mxu0
      %v1070 = vadd.f32 0.0, %v1069
      %v1071 = vpop.f32.mrb[0].mxu0
      %1072 = vmatprep.mubr.f32.mxu0 0.0
      %1073 = vmatmul.mubr.f32.gmra.mrb[0].mxu0 %v971
      %v1074 = vpop.f32.mrb[0].mxu0
      %v1075 = vadd.f32 0.0, %v1074
      %v1076 = vpop.f32.mrb[0].mxu0
      %1077 = vmatprep.mubr.f32.mxu0 0.0
      %1078 = vmatmul.mubr.f32.gmra.mrb[0].mxu0 %v974
      %v1079 = vpop.f32.mrb[0].mxu0
      %v1080 = vadd.f32 0.0, %v1079
      %v1081 = vpop.f32.mrb[0].mxu0
      %1082 = vmatprep.mubr.f32.mxu0 0.0
      %1083 = vmatmul.mubr.f32.gmra.mrb[0].mxu0 %v977
      %v1084 = vpop.f32.mrb[0].mxu0
      %v1085 = vadd.f32 0.0, %v1084
      %v1086 = vpop.f32.mrb[0].mxu0
      %1087 = vmatprep.mubr.f32.mxu0 0.0
      %1088 = vmatmul.mubr.f32.gmra.mrb[0].mxu0 %v980
      %v1089 = vpop.f32.mrb[0].mxu0
      %v1090 = vadd.f32 0.0, %v1089
      %v1091 = vpop.f32.mrb[0].mxu0
      %1092 = vmatprep.mubr.f32.mxu0 0.0
      %1093 = vmatmul.mubr.f32.gmra.mrb[0].mxu0 %v983
      %v1094 = vpop.f32.mrb[0].mxu0
      %v1095 = vadd.f32 0.0, %v1094
      %v1096 = vpop.f32.mrb[0].mxu0
      %1097 = vmatprep.mubr.f32.mxu0 0.0
      %1098 = vmatmul.mubr.f32.gmra.mrb[0].mxu0 %v986
      %v1099 = vpop.f32.mrb[0].mxu0
      %v1100 = vadd.f32 0.0, %v1099
      %v1101 = vpop.f32.mrb[0].mxu0
      %1102 = vmatprep.mubr.f32.mxu0 0.0
      %1103 = vmatmul.mubr.f32.gmra.mrb[0].mxu0 %v989
      %v1104 = vpop.f32.mrb[0].mxu0
      %v1105 = vadd.f32 0.0, %v1104
      %v1106 = vpop.f32.mrb[0].mxu0
      %1107 = vmatprep.mubr.f32.mxu0 0.0
      %1108 = vmatmul.mubr.f32.gmra.mrb[0].mxu0 %v992
      %v1109 = vpop.f32.mrb[0].mxu0
      %v1110 = vadd.f32 0.0, %v1109
      %v1111 = vpop.f32.mrb[0].mxu0
      %1112 = vmatprep.mubr.f32.mxu0 0.0
      %1113 = vmatmul.mubr.f32.gmra.mrb[0].mxu0 %v995
      %v1114 = vpop.f32.mrb[0].mxu0
      %v1115 = vadd.f32 0.0, %v1114
      %v1116 = vpop.f32.mrb[0].mxu0
      %1117 = vmatprep.mubr.f32.mxu0 0.0
      %1118 = vmatmul.mubr.f32.gmra.mrb[0].mxu0 %v998
      %v1119 = vpop.f32.mrb[0].mxu0
      %v1120 = vadd.f32 0.0, %v1119
      %v1121 = vpop.f32.mrb[0].mxu0
      %1122 = vmatprep.mubr.f32.mxu0 0.0
      %1123 = vmatmul.mubr.f32.gmra.mrb[0].mxu0 %v1001
      %v1124 = vpop.f32.mrb[0].mxu0
      %v1125 = vadd.f32 0.0, %v1124
      %v1126 = vpop.f32.mrb[0].mxu0
      %1127 = vdwg.mxu0
      %v1129 = vsel %vm701, %v955, 0
      %v1132 = vsel %vm701, %v956, 0
      %v1135 = vsel %vm701, %v957, 0
      %v1138 = vsel %vm701, %v958, 0
      %v1141 = vsel %vm701, %v959, 0
      %v1144 = vsel %vm701, %v960, 0
      %v1147 = vsel %vm701, %v961, 0
      %v1150 = vsel %vm701, %v962, 0
      %v1153 = vsel %vm701, %v963, 0
      %v1156 = vsel %vm701, %v964, 0
      %v1159 = vsel %vm701, %v965, 0
      %v1162 = vsel %vm701, %v966, 0
      %1164 = vmatprep.subr.mxu0 0.0
      %1165 = vmatpush1.msra.mxu0 %v298
      %1166 = vmatprep.subr.mxu0 0.0
      %1167 = vmatpush1.msra.mxu0 %v299
      %1168 = vmatprep.subr.mxu0 0.0
      %1169 = vmatpush1.msra.mxu0 %v300
      %1170 = vmatprep.subr.mxu0 0.0
      %1171 = vmatpush1.msra.mxu0 %v301
      %1172 = vmatprep.subr.mxu0 0.0
      %1173 = vmatpush1.msra.mxu0 %v302
      %1174 = vmatprep.subr.mxu0 0.0
      %1175 = vmatpush1.msra.mxu0 %v303
      %1176 = vmatprep.subr.mxu0 0.0
      %1177 = vmatpush1.msra.mxu0 %v304
      %1178 = vmatprep.subr.mxu0 0.0
      %1179 = vmatpush1.msra.mxu0 %v305
      %1180 = vmatprep.subr.mxu0 0.0
      %1181 = vmatpush1.msra.mxu0 0.0
      %1182 = vmatprep.subr.mxu0 0.0
      %1183 = vmatpush1.msra.mxu0 0.0
      %1184 = vmatprep.subr.mxu0 0.0
      %1185 = vmatpush1.msra.mxu0 0.0
      %1186 = vmatprep.subr.mxu0 0.0
      %1187 = vmatpush1.msra.mxu0 0.0
      %1188 = vmatprep.subr.mxu0 0.0
      %1189 = vmatpush1.msra.mxu0 0.0
      %1190 = vmatprep.subr.mxu0 0.0
      %1191 = vmatpush1.msra.mxu0 0.0
      %1192 = vmatprep.subr.mxu0 0.0
      %1193 = vmatpush1.msra.mxu0 0.0
      %1194 = vmatprep.subr.mxu0 0.0
      %1195 = vmatpush1.msra.mxu0 0.0
      %1196 = vmatprep.subr.mxu0 0.0
      %1197 = vmatpush1.msra.mxu0 0.0
      %1198 = vmatprep.subr.mxu0 0.0
      %1199 = vmatpush1.msra.mxu0 0.0
      %1200 = vmatprep.subr.mxu0 0.0
      %1201 = vmatpush1.msra.mxu0 0.0
      %1202 = vmatprep.subr.mxu0 0.0
      %1203 = vmatpush1.msra.mxu0 0.0
      %1204 = vmatprep.subr.mxu0 0.0
      %1205 = vmatpush1.msra.mxu0 0.0
      %1206 = vmatprep.subr.mxu0 0.0
      %1207 = vmatpush1.msra.mxu0 0.0
      %1208 = vmatprep.subr.mxu0 0.0
      %1209 = vmatpush1.msra.mxu0 0.0
      %1210 = vmatprep.subr.mxu0 0.0
      %1211 = vmatpush1.msra.mxu0 0.0
      %1212 = vmatprep.subr.mxu0 0.0
      %1213 = vmatpush1.msra.mxu0 0.0
      %1214 = vmatprep.subr.mxu0 0.0
      %1215 = vmatpush1.msra.mxu0 0.0
      %1216 = vmatprep.subr.mxu0 0.0
      %1217 = vmatpush1.msra.mxu0 0.0
      %1218 = vmatprep.subr.mxu0 0.0
      %1219 = vmatpush1.msra.mxu0 0.0
      %1220 = vmatprep.subr.mxu0 0.0
      %1221 = vmatpush1.msra.mxu0 0.0
      %1222 = vmatprep.subr.mxu0 0.0
      %1223 = vmatpush1.msra.mxu0 0.0
      %1224 = vmatprep.subr.mxu0 0.0
      %1225 = vmatpush1.msra.mxu0 0.0
      %1226 = vmatprep.subr.mxu0 0.0
      %1227 = vmatpush1.msra.mxu0 0.0
      %1228 = vmatprep.mubr.f32.mxu0 0.0
      %1229 = vmatmul.mubr.f32.gmra.mrb[0].mxu0 %v1129
      %v1230 = vpop.f32.mrb[0].mxu0
      %v1231 = vadd.f32 0.0, %v1230
      %v1232 = vpop.f32.mrb[0].mxu0
      %1233 = vmatprep.mubr.f32.mxu0 0.0
      %1234 = vmatmul.mubr.f32.gmra.mrb[0].mxu0 %v1132
      %v1235 = vpop.f32.mrb[0].mxu0
      %v1236 = vadd.f32 0.0, %v1235
      %v1237 = vpop.f32.mrb[0].mxu0
      %1238 = vmatprep.mubr.f32.mxu0 0.0
      %1239 = vmatmul.mubr.f32.gmra.mrb[0].mxu0 %v1135
      %v1240 = vpop.f32.mrb[0].mxu0
      %v1241 = vadd.f32 0.0, %v1240
      %v1242 = vpop.f32.mrb[0].mxu0
      %1243 = vmatprep.mubr.f32.mxu0 0.0
      %1244 = vmatmul.mubr.f32.gmra.mrb[0].mxu0 %v1138
      %v1245 = vpop.f32.mrb[0].mxu0
      %v1246 = vadd.f32 0.0, %v1245
      %v1247 = vpop.f32.mrb[0].mxu0
      %1248 = vmatprep.mubr.f32.mxu0 0.0
      %1249 = vmatmul.mubr.f32.gmra.mrb[0].mxu0 %v1141
      %v1250 = vpop.f32.mrb[0].mxu0
      %v1251 = vadd.f32 0.0, %v1250
      %v1252 = vpop.f32.mrb[0].mxu0
      %1253 = vmatprep.mubr.f32.mxu0 0.0
      %1254 = vmatmul.mubr.f32.gmra.mrb[0].mxu0 %v1144
      %v1255 = vpop.f32.mrb[0].mxu0
      %v1256 = vadd.f32 0.0, %v1255
      %v1257 = vpop.f32.mrb[0].mxu0
      %1258 = vmatprep.mubr.f32.mxu0 0.0
      %1259 = vmatmul.mubr.f32.gmra.mrb[0].mxu0 %v1147
      %v1260 = vpop.f32.mrb[0].mxu0
      %v1261 = vadd.f32 0.0, %v1260
      %v1262 = vpop.f32.mrb[0].mxu0
      %1263 = vmatprep.mubr.f32.mxu0 0.0
      %1264 = vmatmul.mubr.f32.gmra.mrb[0].mxu0 %v1150
      %v1265 = vpop.f32.mrb[0].mxu0
      %v1266 = vadd.f32 0.0, %v1265
      %v1267 = vpop.f32.mrb[0].mxu0
      %1268 = vmatprep.mubr.f32.mxu0 0.0
      %1269 = vmatmul.mubr.f32.gmra.mrb[0].mxu0 %v1153
      %v1270 = vpop.f32.mrb[0].mxu0
      %v1271 = vadd.f32 0.0, %v1270
      %v1272 = vpop.f32.mrb[0].mxu0
      %1273 = vmatprep.mubr.f32.mxu0 0.0
      %1274 = vmatmul.mubr.f32.gmra.mrb[0].mxu0 %v1156
      %v1275 = vpop.f32.mrb[0].mxu0
      %v1276 = vadd.f32 0.0, %v1275
      %v1277 = vpop.f32.mrb[0].mxu0
      %1278 = vmatprep.mubr.f32.mxu0 0.0
      %1279 = vmatmul.mubr.f32.gmra.mrb[0].mxu0 %v1159
      %v1280 = vpop.f32.mrb[0].mxu0
      %v1281 = vadd.f32 0.0, %v1280
      %v1282 = vpop.f32.mrb[0].mxu0
      %1283 = vmatprep.mubr.f32.mxu0 0.0
      %1284 = vmatmul.mubr.f32.gmra.mrb[0].mxu0 %v1162
      %v1285 = vpop.f32.mrb[0].mxu0
      %v1286 = vadd.f32 0.0, %v1285
      %v1287 = vpop.f32.mrb[0].mxu0
      %1288 = vdwg.mxu0
      %1289 = vst.msk [vmem:[%s248] sm:$0xff] %vm306, %v1070
      %1290 = vst.msk [vmem:[%s248 + $0x8] sm:$0xff] %vm306, %v1075
      %1291 = vst.msk [vmem:[%s248 + $0x10] sm:$0xff] %vm306, %v1080
      %1292 = vst.msk [vmem:[%s248 + $0x18] sm:$0xff] %vm306, %v1085
      %1293 = vst.msk [vmem:[%s248 + $0x20] sm:$0xff] %vm306, %v1090
      %1294 = vst.msk [vmem:[%s248 + $0x28] sm:$0xff] %vm306, %v1095
      %1295 = vst.msk [vmem:[%s248 + $0x30] sm:$0xff] %vm306, %v1100
      %1296 = vst.msk [vmem:[%s248 + $0x38] sm:$0xff] %vm306, %v1105
      %1297 = vst.msk [vmem:[%s248 + $0x40] sm:$0xff] %vm306, %v1110
      %1298 = vst.msk [vmem:[%s248 + $0x48] sm:$0xff] %vm306, %v1115
      %1299 = vst.msk [vmem:[%s248 + $0x50] sm:$0xff] %vm306, %v1120
      %vm1300 = vcmask 60416
      %1301 = vst.msk [vmem:[%s248 + $0x58] sm:$0xf] %vm1300, %v1125
      %1302 = vst.msk [vmem:[%s248 + $0x60] sm:$0xff] %vm306, %v1231
      %1303 = vst.msk [vmem:[%s248 + $0x68] sm:$0xff] %vm306, %v1236
      %1304 = vst.msk [vmem:[%s248 + $0x70] sm:$0xff] %vm306, %v1241
      %1305 = vst.msk [vmem:[%s248 + $0x78] sm:$0xff] %vm306, %v1246
      %1306 = vst.msk [vmem:[%s248 + $0x80] sm:$0xff] %vm306, %v1251
      %1307 = vst.msk [vmem:[%s248 + $0x88] sm:$0xff] %vm306, %v1256
      %1308 = vst.msk [vmem:[%s248 + $0x90] sm:$0xff] %vm306, %v1261
      %1309 = vst.msk [vmem:[%s248 + $0x98] sm:$0xff] %vm306, %v1266
      %1310 = vst.msk [vmem:[%s248 + $0xa0] sm:$0xff] %vm306, %v1271
      %1311 = vst.msk [vmem:[%s248 + $0xa8] sm:$0xff] %vm306, %v1276
      %1312 = vst.msk [vmem:[%s248 + $0xb0] sm:$0xff] %vm306, %v1281
      %1313 = vst.msk [vmem:[%s248 + $0xb8] sm:$0xf] %vm1300, %v1286
      %s1314 = smul.u32 12, %s19
      %p1315 = scmp.lt.s32.totalorder %s18, 1
      %s1316 = scalar_select %p1315, %s18, 1
      %p1317 = scmp.lt.s32.totalorder %s1314, 11
      %s1318 = scalar_select %p1317, %s1314, 11
      %s1319 = smul.addr %s1316, 24
      %s1320 = sadd.s32 %s1318, %s1319
      %s1321 = smul.addr %s1320, 8
      %s1322 = scalar_lea.vmem %s3, %s1321
      // Predicated region
      $region33: #{scaled_dot_product_attention.1} parent=31 // pred_check
        %p1323 = pneg %p126
      $region34: #{scaled_dot_product_attention.1} parent=31 // pred_check_branch
        %1325 = sbr.rel (%p1323) target = $region36
      $region35: #{scaled_dot_product_attention.1} parent=31 // pred_region
        %s1326 = smul.u32 12, %s19
      $region36: #{scaled_dot_product_attention.1} parent=31 // pred_fallthru
        _
    $region32: #{scaled_dot_product_attention.1} parent=5 // pred_fallthru
      _
    %p1327 = scmp.le.s32.totalorder 2, %s9
    // Predicated region
    $region37: #{scaled_dot_product_attention.1} parent=5 // pred_check
      %p1328 = pneg %p1327
    $region38: #{scaled_dot_product_attention.1} parent=5 // pred_check_branch
      %1330 = sbr.rel (%p1328) target = $region40
    $region39: #{scaled_dot_product_attention.1} parent=5 // pred_region
      %s1331 = ssub.s32 %s9, 2
      // Predicated region
      $region41: #{scaled_dot_product_attention.1} parent=39 // pred_check
        %p1332 = pneg %p132
      $region42: #{scaled_dot_product_attention.1} parent=39 // pred_check_branch
        %1334 = sbr.rel (%p1332) target = $region44
      $region43: #{scaled_dot_product_attention.1} parent=39 // pred_region
        %s1335 = smul.u32 12, %s21
        %p1336 = scmp.lt.s32.totalorder %s20, 1
        %s1337 = scalar_select %p1336, %s20, 1
        %p1338 = scmp.lt.s32.totalorder %s1335, 11
        %s1339 = scalar_select %p1338, %s1335, 11
        %s1340 = smul.addr %s1337, 24
        %s1341 = sadd.s32 %s1339, %s1340
        %s1342 = smul.addr %s1341, 8
        %s1343 = scalar_lea.vmem %s3, %s1342
      $region44: #{scaled_dot_product_attention.1} parent=39 // pred_fallthru
        _
    $region40: #{scaled_dot_product_attention.1} parent=5 // pred_fallthru
      _
  $region6: #{scaled_dot_product_attention.1} parent=0 // loop_footer
    %s13 = sadd.s32 1, %s9
  $region7: #{scaled_dot_product_attention.1} parent=0 // loop_footer_branch
    %8 = sbr.rel target = $region3
  $region8: #{scaled_dot_product_attention.1} parent=0 // loop_exit
    _

</llo_original>
